<compile_context>
chip_gen: v6e
topology: v6e:2x2x1
jax: 0.10.0
libtpu: 0.0.40
codegen_flags: <defaults>
</compile_context>

<pallas_src>
import functools

import numpy as np

import jax
import jax.numpy as jnp
from jax.experimental import pallas as pl
from jax.experimental.pallas import tpu as pltpu


# -----------------------------------------------------------------------------
# Config (small stand-in shapes consistent with the module interface)
# -----------------------------------------------------------------------------
B, C_IN, IMG = 2, 4, 16          # data-config stand-ins (small shapes)
K_STRIDE = 4                     # backbone downsample factor
FEAT = 32                        # backbone feature channels
H1 = W1 = IMG // K_STRIDE        # backbone spatial output (4 x 4)
P = H1 * W1                      # spatial positions per feature map (16)
CK = C_IN * K_STRIDE * K_STRIDE  # patch length (64)
TH_HID = 32                      # transform-head hidden channels
N_TRANSFORM = 6                  # affine transform params


def _align8(x: int) -> int:
    return (x + 7) & ~7


# Row layout of the packed 32-wide parameter array (all offsets 8-aligned so
# every in-kernel slice starts on a sublane-tile boundary).
OFF_BB_W = 0                                      # (CK, FEAT)
OFF_TH_W1 = _align8(OFF_BB_W + CK)                # (2*CK, TH_HID)
OFF_GSUM = _align8(OFF_TH_W1 + 2 * CK)            # (P*6, 6) column-group sum
OFF_MBLK = _align8(OFF_GSUM + P * N_TRANSFORM)    # (B*P, B*P) block-diag mask
OFF_RSUM = _align8(OFF_MBLK + B * P)              # (B, B*P) per-batch row sum
OFF_BB_B = _align8(OFF_RSUM + B)                  # (1, FEAT)
OFF_TH_B1 = _align8(OFF_BB_B + 1)                 # (1, TH_HID)
OFF_WTILE = _align8(OFF_TH_B1 + 1)                # (1, B*P) permuted+tiled fm_w
OFF_FM_B = _align8(OFF_WTILE + 1)                 # (1, 1)
OFF_TH_B2 = _align8(OFF_FM_B + 1)                 # (1, 6)
N_WPACK_ROWS = _align8(OFF_TH_B2 + 1)
WPACK_COLS = max(FEAT, TH_HID, B * P, N_TRANSFORM)


# -----------------------------------------------------------------------------
# Pallas kernel: the whole forward pass, VMEM-resident, no grid.
# TODO(synk): when the real ResNet50 replaces the stand-in backbone, add a grid
# over batch / spatial tiles with dimension_semantics=("parallel", ...) (v7x
# has 2 TensorCores) plus BlockSpec tiling sized for 64 MiB v7x VMEM, and cast
# the large matmul operands to bfloat16 with preferred_element_type=f32.
# -----------------------------------------------------------------------------
def _fused_forward_kernel(xp_ref, wp_ref, fc_ref, mp_ref, tp_ref, *,
                          norm_feature):
    f32 = jnp.float32
    bp = B * P
    eps = 1e-6

    xp = xp_ref[...]                                         # (2*B*P, CK)

    # ---------------- backbone (x1; x2 stacked): one patch matmul ------------
    bb_w = wp_ref[OFF_BB_W:OFF_BB_W + CK, 0:FEAT]            # (CK, FEAT)
    bb_b = wp_ref[OFF_BB_B:OFF_BB_B + 1, 0:FEAT]             # (1, FEAT)
    feat = jnp.dot(xp, bb_w, preferred_element_type=f32) + bb_b
    feat = jnp.maximum(feat, 0.0)
    if norm_feature:
        # feature_l2_norm: norm = sqrt(sum x^2) + 1e-6 (eps AFTER sqrt, exactly
        # like the reference `f.norm(dim=1) + eps`), exact divide for parity.
        nrm = jnp.sqrt(jnp.sum(feat * feat, axis=-1, keepdims=True)) + eps
        feat = feat / nrm
    feat_s = feat[0:bp, :]            # backbone(x1) rows: (b, i = h*w1 + w)
    feat_t = feat[bp:2 * bp, :]       # backbone(x2) rows: (b, q = x*w2 + y)

    # ---------------- correlation + matcher head ------------------------------
    # Single (B*P, B*P) matmul; the 0/1 block-diagonal mask keeps only the
    # same-batch blocks (equivalent to the per-batch einsum of the reference).
    corr = jax.lax.dot_general(
        feat_t, feat_s, dimension_numbers=(((1,), (1,)), ((), ())),
        preferred_element_type=f32)                          # (B*P, B*P)
    mblk = wp_ref[OFF_MBLK:OFF_MBLK + bp, 0:bp]              # (B*P, B*P) 0/1
    c = corr * mblk
    if norm_feature:
        c = jnp.maximum(c, 0.0)                              # relu
        # feature_l2_norm over the h1*w1 "channel" axis (columns); off-block
        # entries are zero so the row sums only see the own-batch block.
        nq = jnp.sqrt(jnp.sum(c * c, axis=-1, keepdims=True)) + eps
        c = c / nq
    # Matcher head: 1x1 conv over channels + sigmoid.  The einsum
    # 'bfhw,bfxy->bwhxy' + view channel reorder is folded into the (permuted,
    # batch-tiled) weight row, so corr is never transposed / reordered.
    wtile = wp_ref[OFF_WTILE:OFF_WTILE + 1, 0:bp]            # (1, B*P)
    fm_b = wp_ref[OFF_FM_B:OFF_FM_B + 1, 0:1]                # (1, 1)
    logits = jax.lax.dot_general(
        wtile, c, dimension_numbers=(((1,), (1,)), ((), ())),
        preferred_element_type=f32) + fm_b                   # (1, B*P)
    mp_ref[...] = 1.0 / (1.0 + jnp.exp(-logits))             # one lane-dense store

    # ---------------- transform head ------------------------------------------
    # conv1 on concat([x1, x2], ch): catp == hstack(x1p, x2p) == xp row halves,
    # so no separate catp input is needed.
    w1a = wp_ref[OFF_TH_W1:OFF_TH_W1 + CK, 0:TH_HID]         # x1-channel rows
    w1b = wp_ref[OFF_TH_W1 + CK:OFF_TH_W1 + 2 * CK, 0:TH_HID]  # x2-channel rows
    th_b1 = wp_ref[OFF_TH_B1:OFF_TH_B1 + 1, 0:TH_HID]        # (1, TH_HID)
    x1p = xp[0:bp, :]
    x2p = xp[bp:2 * bp, :]
    th1 = (jnp.dot(x1p, w1a, preferred_element_type=f32)
           + jnp.dot(x2p, w1b, preferred_element_type=f32) + th_b1)
    th1 = jnp.maximum(th1, 0.0)                              # (B*P, TH_HID)

    # Final FC  out[b,n] = sum_{p,h} th1[b*P+p, h] * W2[p*TH_HID+h, n] + b2,
    # realized with plain 2D matmuls (no sublane->lane reshape):
    #   full = th1 @ Wstack            Wstack[h, p*6+n] = W2[p*TH_HID+h, n]
    #   d    = (full * Msel) @ Gsum    Msel selects columns with p == r % P
    #   out  = Rsum @ d + b2           Rsum sums the P rows of each batch
    wstack = fc_ref[0:TH_HID, :]                             # (TH_HID, P*6)
    msel = fc_ref[TH_HID:TH_HID + bp, :]                     # (B*P,   P*6) 0/1
    full = jnp.dot(th1, wstack, preferred_element_type=f32)  # (B*P, P*6)
    gsum = wp_ref[OFF_GSUM:OFF_GSUM + P * N_TRANSFORM, 0:N_TRANSFORM]
    d = jnp.dot(full * msel, gsum, preferred_element_type=f32)   # (B*P, 6)
    rsum = wp_ref[OFF_RSUM:OFF_RSUM + B, 0:bp]               # (B, B*P) 0/1
    th_b2 = wp_ref[OFF_TH_B2:OFF_TH_B2 + 1, 0:N_TRANSFORM]   # (1, 6)
    tp_ref[...] = jnp.dot(rsum, d, preferred_element_type=f32) + th_b2


# -----------------------------------------------------------------------------
# Plain-JAX glue (patch extraction on tiny tensors only)
# -----------------------------------------------------------------------------
def extract_patches(x, k):
    """Non-overlapping k x k patches of NCHW x -> (B, (H//k)*(W//k), C*k*k)."""
    b, c, h, w = x.shape
    x = x.reshape(b, c, h // k, k, w // k, k)
    x = x.transpose(0, 2, 4, 1, 3, 5)     # (B, H//k, W//k, C, k, k)
    return x.reshape(b, (h // k) * (w // k), c * k * k)


# -----------------------------------------------------------------------------
# Parameters
# -----------------------------------------------------------------------------
def init_params(key):
    ks = jax.random.split(key, 4)
    p = {}
    # TODO(synk): Resnet50 backbone definition not provided; 4x4/stride-4
    # conv (C_IN -> FEAT) + ReLU stand-in with the same interface.
    p["bb_w"] = 0.05 * jax.random.normal(ks[0], (CK, FEAT), jnp.float32)
    p["bb_b"] = jnp.zeros((FEAT,), jnp.float32)
    # TODO(synk): CombinedImageTransformPredictor_Small definition not
    # provided; conv(2*C_IN -> TH_HID) + ReLU then FC -> 6 stand-in.
    p["th_w1"] = 0.05 * jax.random.normal(ks[1], (2 * CK, TH_HID), jnp.float32)
    p["th_b1"] = jnp.zeros((TH_HID,), jnp.float32)
    p["th_w2"] = 0.05 * jax.random.normal(ks[2], (P * TH_HID, N_TRANSFORM), jnp.float32)
    p["th_b2"] = jnp.zeros((N_TRANSFORM,), jnp.float32)
    # TODO(synk): FeatureMatcherHead_Small definition not provided; 1x1 conv
    # (h1*w1 -> 1) + sigmoid stand-in.
    p["fm_w"] = 0.05 * jax.random.normal(ks[3], (H1 * W1, 1), jnp.float32)
    p["fm_b"] = jnp.zeros((1,), jnp.float32)
    return p


def pack_params(params):
    """One-time host-side packing of every parameter / constant the kernel
    needs into two arrays (3 input DMAs total, none of this in the hot path)."""
    f32 = np.float32
    bp = B * P

    wpk = np.zeros((N_WPACK_ROWS, WPACK_COLS), f32)
    wpk[OFF_BB_W:OFF_BB_W + CK, :FEAT] = np.asarray(params["bb_w"], f32)
    wpk[OFF_TH_W1:OFF_TH_W1 + 2 * CK, :TH_HID] = np.asarray(params["th_w1"], f32)
    # Gsum[p*6+n, n'] = (n == n')
    wpk[OFF_GSUM:OFF_GSUM + P * N_TRANSFORM, :N_TRANSFORM] = np.tile(
        np.eye(N_TRANSFORM, dtype=f32), (P, 1))
    # Block-diagonal mask selecting same-batch correlation blocks.
    wpk[OFF_MBLK:OFF_MBLK + bp, :bp] = np.kron(
        np.eye(B, dtype=f32), np.ones((P, P), f32))
    # Rsum[b, r] = (r // P == b)
    wpk[OFF_RSUM:OFF_RSUM + B, :bp] = np.kron(
        np.eye(B, dtype=f32), np.ones((1, P), f32))
    wpk[OFF_BB_B, :FEAT] = np.asarray(params["bb_b"], f32)
    wpk[OFF_TH_B1, :TH_HID] = np.asarray(params["th_b1"], f32)
    # einsum('bfhw,bfxy->bwhxy') + view(b, h1*w1, h2, w2) reorders the channel
    # axis to j = w*h1 + h.  relu / L2-norm are permutation invariant and the
    # 1x1 matcher conv is linear, so fold the reorder into the weight, then
    # tile it across the batch blocks of the (B*P, B*P) correlation matrix.
    fm_w_perm = np.asarray(params["fm_w"], f32).reshape(W1, H1).T.reshape(P)
    wpk[OFF_WTILE, :bp] = np.tile(fm_w_perm, B)
    wpk[OFF_FM_B, 0] = np.asarray(params["fm_b"], f32)[0]
    wpk[OFF_TH_B2, :N_TRANSFORM] = np.asarray(params["th_b2"], f32)

    # FC pack: Wstack[h, p*6+n] = W2[p*TH_HID+h, n];  Msel[r, p*6+n] = (r%P == p)
    w2r = np.asarray(params["th_w2"], f32).reshape(P, TH_HID, N_TRANSFORM)
    wstack = w2r.transpose(1, 0, 2).reshape(TH_HID, P * N_TRANSFORM)
    r_mod = (np.arange(bp) % P)[:, None]
    c_div = (np.arange(P * N_TRANSFORM) // N_TRANSFORM)[None, :]
    msel = (r_mod == c_div).astype(f32)
    fcpk = np.zeros((TH_HID + bp, P * N_TRANSFORM), f32)
    fcpk[0:TH_HID] = wstack
    fcpk[TH_HID:TH_HID + bp] = msel

    return {"w_pack": jnp.asarray(wpk), "fc_pack": jnp.asarray(fcpk)}


# -----------------------------------------------------------------------------
# Forward pass: one pallas_call
# -----------------------------------------------------------------------------
def forward(packed, x1, x2, norm_feature=True):
    b, c, h, w = x1.shape
    assert (b, c, h, w) == (B, C_IN, IMG, IMG), \
        "packed parameters are built for the module's data config"
    h2 = w2 = h // K_STRIDE

    # Layout glue: NCHW -> channels-last patch matrices (tiny tensors).
    x1p = extract_patches(x1, K_STRIDE).reshape(b * P, CK)
    x2p = extract_patches(x2, K_STRIDE).reshape(b * P, CK)
    xp = jnp.concatenate([x1p, x2p], axis=0)                  # (2*B*P, CK)

    vmem = pltpu.MemorySpace.VMEM
    mp, transform_pred = pl.pallas_call(
        functools.partial(_fused_forward_kernel, norm_feature=norm_feature),
        out_shape=(jax.ShapeDtypeStruct((1, b * P), jnp.float32),
                   jax.ShapeDtypeStruct((b, N_TRANSFORM), jnp.float32)),
        in_specs=[pl.BlockSpec(memory_space=vmem),
                  pl.BlockSpec(memory_space=vmem),
                  pl.BlockSpec(memory_space=vmem)],
        out_specs=(pl.BlockSpec(memory_space=vmem),
                   pl.BlockSpec(memory_space=vmem)),
        compiler_params=pltpu.CompilerParams(
            vmem_limit_bytes=16 * 1024 * 1024),
    )(xp, packed["w_pack"], packed["fc_pack"])

    match_prob = mp.reshape(b, 1, h2, w2)                     # NCHW
    return match_prob, transform_pred


# -----------------------------------------------------------------------------
# Pure-jnp reference (mirrors the PyTorch module with the same stand-ins)
# -----------------------------------------------------------------------------
def forward_reference(params, x1, x2, norm_feature=True):
    b = x1.shape[0]

    def backbone(x):
        xp = extract_patches(x, K_STRIDE)                              # (B,P,CK)
        f = jnp.maximum(xp @ params["bb_w"] + params["bb_b"], 0.0)     # (B,P,F)
        return f.reshape(b, H1, W1, FEAT).transpose(0, 3, 1, 2)        # NCHW

    def l2norm(f, axis):
        return f / (jnp.sqrt(jnp.sum(f * f, axis=axis, keepdims=True)) + 1e-6)

    s2 = backbone(x1)
    t2 = backbone(x2)
    if norm_feature:
        s2 = l2norm(s2, 1)
        t2 = l2norm(t2, 1)

    cp = extract_patches(jnp.concatenate([x1, x2], axis=1), K_STRIDE)  # (B,P,2CK)
    th1 = jnp.maximum(cp @ params["th_w1"] + params["th_b1"], 0.0)     # (B,P,TH)
    transform_pred = th1.reshape(b, P * TH_HID) @ params["th_w2"] + params["th_b2"]

    corr = jnp.einsum('bfhw,bfxy->bwhxy', s2, t2).reshape(b, H1 * W1, H1, W1)
    if norm_feature:
        corr = l2norm(jnp.maximum(corr, 0.0), 1)
    logits = jnp.einsum('bchw,c->bhw', corr, params["fm_w"][:, 0]) + params["fm_b"][0]
    match_prob = jax.nn.sigmoid(logits)[:, None, :, :]
    return match_prob, transform_pred


# -----------------------------------------------------------------------------
if __name__ == "__main__":
    key = jax.random.PRNGKey(0)
    k1, k2, kp = jax.random.split(key, 3)
    x1 = jax.random.normal(k1, (B, C_IN, IMG, IMG), jnp.float32)
    x2 = jax.random.normal(k2, (B, C_IN, IMG, IMG), jnp.float32)
    params = init_params(kp)
    packed = pack_params(params)          # one-time packing, outside hot path

    match_prob, transform_pred = jax.jit(forward)(packed, x1, x2)
    jax.block_until_ready((match_prob, transform_pred))

    assert match_prob.shape == (B, 1, IMG // K_STRIDE, IMG // K_STRIDE)
    assert transform_pred.shape == (B, N_TRANSFORM)
    assert bool(jnp.all(jnp.isfinite(match_prob)))
    assert bool(jnp.all(jnp.isfinite(transform_pred)))

    # Parity check against a pure-jnp mirror of the module.
    mp_r, tp_r = forward_reference(params, x1, x2)
    assert bool(jnp.allclose(match_prob, mp_r, atol=2e-3, rtol=2e-3))
    assert bool(jnp.allclose(transform_pred, tp_r, atol=2e-3, rtol=2e-3))

    print("KERNEL_OK")
</pallas_src>

<mosaic_0001>
module attributes {stable_mosaic.version = 11 : i64} {
  func.func @_fused_forward_kernel(%arg0: memref<64x64xf32, #tpu.memory_space<vmem>>, %arg1: memref<368x32xf32, #tpu.memory_space<vmem>>, %arg2: memref<64x96xf32, #tpu.memory_space<vmem>>, %arg3: memref<1x32xf32, #tpu.memory_space<vmem>>, %arg4: memref<2x6xf32, #tpu.memory_space<vmem>>) attributes {dimension_semantics = [], scalar_prefetch = 0 : i64, scratch_operands = 0 : i64, tpu.core_type = #tpu.core_type<tc>} {
    %c0 = arith.constant 0 : index
    %c0_0 = arith.constant 0 : index
    %0 = vector.load %arg0[%c0, %c0_0] : memref<64x64xf32, #tpu.memory_space<vmem>>, vector<64x64xf32>
    %c0_1 = arith.constant 0 : index
    %c0_2 = arith.constant 0 : index
    %1 = vector.load %arg1[%c0_1, %c0_2] : memref<368x32xf32, #tpu.memory_space<vmem>>, vector<64x32xf32>
    %c328 = arith.constant 328 : index
    %c0_3 = arith.constant 0 : index
    %2 = vector.load %arg1[%c328, %c0_3] : memref<368x32xf32, #tpu.memory_space<vmem>>, vector<1x32xf32>
    %cst = arith.constant dense<0.000000e+00> : vector<64x32xf32>
    %3 = tpu.matmul %0, %1, %cst {dimension_numbers = #tpu.dot_dimension_numbers<[1], [0], [0], [1], [0, 0, 1, 1], [], []>} : vector<64x64xf32>, vector<64x32xf32>, vector<64x32xf32> -> vector<64x32xf32>
    %4 = vector.broadcast %2 : vector<1x32xf32> to vector<64x32xf32>
    %5 = arith.addf %3, %4 : vector<64x32xf32>
    %cst_4 = arith.constant 0.000000e+00 : f32
    %6 = vector.broadcast %cst_4 : f32 to vector<64x32xf32>
    %7 = arith.maximumf %5, %6 : vector<64x32xf32>
    %8 = arith.mulf %7, %7 : vector<64x32xf32>
    %cst_5 = arith.constant dense<0.000000e+00> : vector<64xf32>
    %9 = vector.multi_reduction <add>, %8, %cst_5 [1] : vector<64x32xf32> to vector<64xf32>
    %10 = vector.shape_cast %9 : vector<64xf32> to vector<64x1xf32>
    %11 = math.sqrt %10 : vector<64x1xf32>
    %cst_6 = arith.constant 9.99999997E-7 : f32
    %12 = vector.broadcast %cst_6 : f32 to vector<64x1xf32>
    %13 = arith.addf %11, %12 : vector<64x1xf32>
    %14 = vector.broadcast %13 : vector<64x1xf32> to vector<64x32xf32>
    %15 = arith.divf %7, %14 : vector<64x32xf32>
    %16 = vector.extract_strided_slice %15 {offsets = [0, 0], sizes = [32, 32], strides = [1, 1]} : vector<64x32xf32> to vector<32x32xf32>
    %17 = vector.extract_strided_slice %15 {offsets = [32, 0], sizes = [32, 32], strides = [1, 1]} : vector<64x32xf32> to vector<32x32xf32>
    %cst_7 = arith.constant dense<0.000000e+00> : vector<32x32xf32>
    %18 = tpu.matmul %17, %16, %cst_7 {dimension_numbers = #tpu.dot_dimension_numbers<[1], [1], [0], [0], [0, 0, 1, 0], [], []>} : vector<32x32xf32>, vector<32x32xf32>, vector<32x32xf32> -> vector<32x32xf32>
    %c288 = arith.constant 288 : index
    %c0_8 = arith.constant 0 : index
    %19 = vector.load %arg1[%c288, %c0_8] : memref<368x32xf32, #tpu.memory_space<vmem>>, vector<32x32xf32>
    %20 = arith.mulf %18, %19 : vector<32x32xf32>
    %cst_9 = arith.constant 0.000000e+00 : f32
    %21 = vector.broadcast %cst_9 : f32 to vector<32x32xf32>
    %22 = arith.maximumf %20, %21 : vector<32x32xf32>
    %23 = arith.mulf %22, %22 : vector<32x32xf32>
    %cst_10 = arith.constant dense<0.000000e+00> : vector<32xf32>
    %24 = vector.multi_reduction <add>, %23, %cst_10 [1] : vector<32x32xf32> to vector<32xf32>
    %25 = vector.shape_cast %24 : vector<32xf32> to vector<32x1xf32>
    %26 = math.sqrt %25 : vector<32x1xf32>
    %cst_11 = arith.constant 9.99999997E-7 : f32
    %27 = vector.broadcast %cst_11 : f32 to vector<32x1xf32>
    %28 = arith.addf %26, %27 : vector<32x1xf32>
    %29 = vector.broadcast %28 : vector<32x1xf32> to vector<32x32xf32>
    %30 = arith.divf %22, %29 : vector<32x32xf32>
    %c344 = arith.constant 344 : index
    %c0_12 = arith.constant 0 : index
    %31 = vector.load %arg1[%c344, %c0_12] : memref<368x32xf32, #tpu.memory_space<vmem>>, vector<1x32xf32>
    %c352 = arith.constant 352 : index
    %c0_13 = arith.constant 0 : index
    %32 = vector.load %arg1[%c352, %c0_13] : memref<368x32xf32, #tpu.memory_space<vmem>>, vector<1x1xf32>
    %cst_14 = arith.constant dense<0.000000e+00> : vector<1x32xf32>
    %33 = tpu.matmul %31, %30, %cst_14 {dimension_numbers = #tpu.dot_dimension_numbers<[1], [1], [0], [0], [0, 0, 1, 0], [], []>} : vector<1x32xf32>, vector<32x32xf32>, vector<1x32xf32> -> vector<1x32xf32>
    %34 = vector.broadcast %32 : vector<1x1xf32> to vector<1x32xf32>
    %35 = arith.addf %33, %34 : vector<1x32xf32>
    %cst_15 = arith.constant 0.000000e+00 : f32
    %36 = vector.broadcast %cst_15 : f32 to vector<1x32xf32>
    %37 = arith.subf %36, %35 : vector<1x32xf32>
    %38 = math.exp %37 : vector<1x32xf32>
    %cst_16 = arith.constant 1.000000e+00 : f32
    %39 = vector.broadcast %cst_16 : f32 to vector<1x32xf32>
    %40 = arith.addf %39, %38 : vector<1x32xf32>
    %cst_17 = arith.constant 1.000000e+00 : f32
    %41 = vector.broadcast %cst_17 : f32 to vector<1x32xf32>
    %42 = arith.divf %41, %40 : vector<1x32xf32>
    %c0_18 = arith.constant 0 : index
    %c0_19 = arith.constant 0 : index
    %43 = vector.load %arg3[%c0_18, %c0_19] : memref<1x32xf32, #tpu.memory_space<vmem>>, vector<1x32xf32>
    tpu.vector_store %arg3[%c0_18, %c0_19], %42 {strides = array<i32>} : memref<1x32xf32, #tpu.memory_space<vmem>>, vector<1x32xf32>,
    %c64 = arith.constant 64 : index
    %c0_20 = arith.constant 0 : index
    %44 = vector.load %arg1[%c64, %c0_20] : memref<368x32xf32, #tpu.memory_space<vmem>>, vector<64x32xf32>
    %c128 = arith.constant 128 : index
    %c0_21 = arith.constant 0 : index
    %45 = vector.load %arg1[%c128, %c0_21] : memref<368x32xf32, #tpu.memory_space<vmem>>, vector<64x32xf32>
    %c336 = arith.constant 336 : index
    %c0_22 = arith.constant 0 : index
    %46 = vector.load %arg1[%c336, %c0_22] : memref<368x32xf32, #tpu.memory_space<vmem>>, vector<1x32xf32>
    %47 = vector.extract_strided_slice %0 {offsets = [0, 0], sizes = [32, 64], strides = [1, 1]} : vector<64x64xf32> to vector<32x64xf32>
    %48 = vector.extract_strided_slice %0 {offsets = [32, 0], sizes = [32, 64], strides = [1, 1]} : vector<64x64xf32> to vector<32x64xf32>
    %cst_23 = arith.constant dense<0.000000e+00> : vector<32x32xf32>
    %49 = tpu.matmul %47, %44, %cst_23 {dimension_numbers = #tpu.dot_dimension_numbers<[1], [0], [0], [1], [0, 0, 1, 1], [], []>} : vector<32x64xf32>, vector<64x32xf32>, vector<32x32xf32> -> vector<32x32xf32>
    %cst_24 = arith.constant dense<0.000000e+00> : vector<32x32xf32>
    %50 = tpu.matmul %48, %45, %cst_24 {dimension_numbers = #tpu.dot_dimension_numbers<[1], [0], [0], [1], [0, 0, 1, 1], [], []>} : vector<32x64xf32>, vector<64x32xf32>, vector<32x32xf32> -> vector<32x32xf32>
    %51 = arith.addf %49, %50 : vector<32x32xf32>
    %52 = vector.broadcast %46 : vector<1x32xf32> to vector<32x32xf32>
    %53 = arith.addf %51, %52 : vector<32x32xf32>
    %cst_25 = arith.constant 0.000000e+00 : f32
    %54 = vector.broadcast %cst_25 : f32 to vector<32x32xf32>
    %55 = arith.maximumf %53, %54 : vector<32x32xf32>
    %c0_26 = arith.constant 0 : index
    %c0_27 = arith.constant 0 : index
    %56 = vector.load %arg2[%c0_26, %c0_27] : memref<64x96xf32, #tpu.memory_space<vmem>>, vector<32x96xf32>
    %c32 = arith.constant 32 : index
    %c0_28 = arith.constant 0 : index
    %57 = vector.load %arg2[%c32, %c0_28] : memref<64x96xf32, #tpu.memory_space<vmem>>, vector<32x96xf32>
    %cst_29 = arith.constant dense<0.000000e+00> : vector<32x96xf32>
    %58 = tpu.matmul %55, %56, %cst_29 {dimension_numbers = #tpu.dot_dimension_numbers<[1], [0], [0], [1], [0, 0, 1, 1], [], []>} : vector<32x32xf32>, vector<32x96xf32>, vector<32x96xf32> -> vector<32x96xf32>
    %c192 = arith.constant 192 : index
    %c0_30 = arith.constant 0 : index
    %59 = vector.load %arg1[%c192, %c0_30] : memref<368x32xf32, #tpu.memory_space<vmem>>, vector<96x6xf32>
    %60 = arith.mulf %58, %57 : vector<32x96xf32>
    %cst_31 = arith.constant dense<0.000000e+00> : vector<32x6xf32>
    %61 = tpu.matmul %60, %59, %cst_31 {dimension_numbers = #tpu.dot_dimension_numbers<[1], [0], [0], [1], [0, 0, 1, 1], [], []>} : vector<32x96xf32>, vector<96x6xf32>, vector<32x6xf32> -> vector<32x6xf32>
    %c320 = arith.constant 320 : index
    %c0_32 = arith.constant 0 : index
    %62 = vector.load %arg1[%c320, %c0_32] : memref<368x32xf32, #tpu.memory_space<vmem>>, vector<2x32xf32>
    %c360 = arith.constant 360 : index
    %c0_33 = arith.constant 0 : index
    %63 = vector.load %arg1[%c360, %c0_33] : memref<368x32xf32, #tpu.memory_space<vmem>>, vector<1x6xf32>
    %cst_34 = arith.constant dense<0.000000e+00> : vector<2x6xf32>
    %64 = tpu.matmul %62, %61, %cst_34 {dimension_numbers = #tpu.dot_dimension_numbers<[1], [0], [0], [1], [0, 0, 1, 1], [], []>} : vector<2x32xf32>, vector<32x6xf32>, vector<2x6xf32> -> vector<2x6xf32>
    %65 = vector.broadcast %63 : vector<1x6xf32> to vector<2x6xf32>
    %66 = arith.addf %64, %65 : vector<2x6xf32>
    %c0_35 = arith.constant 0 : index
    %c0_36 = arith.constant 0 : index
    %67 = vector.load %arg4[%c0_35, %c0_36] : memref<2x6xf32, #tpu.memory_space<vmem>>, vector<2x6xf32>
    tpu.vector_store %arg4[%c0_35, %c0_36], %66 {strides = array<i32>} : memref<2x6xf32, #tpu.memory_space<vmem>>, vector<2x6xf32>,
    return
  }
}

</mosaic_0001>

<llo_original>
// kernel: forward.1
$region0: #{forward.1}
  #allocation0 [shape = 'u32[]', space=smem, size = 0x4, offset = 0x4, fixed_abs, tag = 'smem constant byte address 0x4 - core index']
  #allocation1 [shape = 'u32[144,128]{1,0:T(1,128)}', space=vmem, size = 0x12000, scoped, tag = 'internal scratch']
  %s0 = inlined_call_operand.vmem [shape: f32[64,64], index: 0, kind: input, shape index: {}]
  %s1 = inlined_call_operand.vmem [shape: f32[368,32], index: 1, kind: input, shape index: {}]
  %s2 = inlined_call_operand.vmem [shape: f32[64,96], index: 2, kind: input, shape index: {}]
  %s3 = inlined_call_operand.vmem [shape: f32[1,32], index: 3, kind: output, shape index: {0}]
  %s4 = inlined_call_operand.hbm [shape: f32[2,6], index: 4, kind: output, shape index: {1}]
  %5 = xla_tuple %s3, %s4
  %s6 = sld [smem:[#allocation0]]
  $region30: #{forward.1} parent=0
    _
  %s8 = ssub.s32 1, %s6
  %s9 = scalar_select 0, %s8, %s6
  $region1: #{forward.1} parent=0
    #allocation2 [shape = 'u8[1024]{0}', space=vmem, size = 0x400, scoped, tag = 'output window, operand 1, single buffered']
    #allocation3 [shape = 's32[1]{0}', space=sflag, size = 0x4, scoped, tag = 'scoped memory for forward.1']
    %10 = vsyncpa [#allocation3], 0
    // Predicated region
    $region2: #{forward.1} parent=1 // pred_check
      _
    $region3: #{forward.1} parent=1 // pred_check_branch
      %12 = sbr.rel (0) target = $region5
    $region4: #{forward.1} parent=1 // pred_region
      _
    $region5: #{forward.1} parent=1 // pred_fallthru
      _
    // Predicated region
    $region6: #{forward.1} parent=1 // pred_check
      _
    $region7: #{forward.1} parent=1 // pred_check_branch
      %14 = sbr.rel (0) target = $region9
    $region8: #{forward.1} parent=1 // pred_region
      _
    $region9: #{forward.1} parent=1 // pred_fallthru
      _
    // Predicated region
    $region10: #{forward.1} parent=1 // pred_check
      _
    $region11: #{forward.1} parent=1 // pred_check_branch
      %16 = sbr.rel (0) target = $region13
    $region12: #{forward.1} parent=1 // pred_region
      _
    $region13: #{forward.1} parent=1 // pred_fallthru
      _
    %v17 = vld [vmem:[%s0] sm:$0xff]
    %v18 = vld [vmem:[%s0 + $0x8] sm:$0xff]
    %v19 = vld [vmem:[%s0 + $0x10] sm:$0xff]
    %v20 = vld [vmem:[%s0 + $0x18] sm:$0xff]
    %v21 = vld [vmem:[%s0 + $0x20] sm:$0xff]
    %v22 = vld [vmem:[%s0 + $0x28] sm:$0xff]
    %v23 = vld [vmem:[%s0 + $0x30] sm:$0xff]
    %v24 = vld [vmem:[%s0 + $0x38] sm:$0xff]
    %v25 = vld [vmem:[%s1] sm:$0xff]
    %v26 = vld [vmem:[%s1 + $0x8] sm:$0xff]
    %v27 = vld [vmem:[%s1 + $0x10] sm:$0xff]
    %v28 = vld [vmem:[%s1 + $0x18] sm:$0xff]
    %v29 = vld [vmem:[%s1 + $0x20] sm:$0xff]
    %v30 = vld [vmem:[%s1 + $0x28] sm:$0xff]
    %v31 = vld [vmem:[%s1 + $0x30] sm:$0xff]
    %v32 = vld [vmem:[%s1 + $0x38] sm:$0xff]
    %v33 = vld [vmem:[%s1 + $0x148] sm:$0x1]
    %v34 = vlaneseq
    %v35 = vshrl.u32 %v34, 7
    %v36 = vsub.s32 0, %v35
    %v37 = vrot.slane %v33, %v36
    %vm38 = vcmask 523264
    %v40 = vsel %vm38, %v17, 0
    %v43 = vsel %vm38, %v18, 0
    %v46 = vsel %vm38, %v19, 0
    %v49 = vsel %vm38, %v20, 0
    %v52 = vsel %vm38, %v21, 0
    %v55 = vsel %vm38, %v22, 0
    %v58 = vsel %vm38, %v23, 0
    %v61 = vsel %vm38, %v24, 0
    %63 = vmatprep.subr.mxu0 0.0
    %64 = vmatpush1.msra.mxu0 0.0
    %65 = vmatprep.subr.mxu0 0.0
    %66 = vmatpush1.msra.mxu0 0.0
    %67 = vmatprep.subr.mxu0 0.0
    %68 = vmatpush1.msra.mxu0 0.0
    %69 = vmatprep.subr.mxu0 0.0
    %70 = vmatpush1.msra.mxu0 0.0
    %71 = vmatprep.subr.mxu0 0.0
    %72 = vmatpush1.msra.mxu0 0.0
    %73 = vmatprep.subr.mxu0 0.0
    %74 = vmatpush1.msra.mxu0 0.0
    %75 = vmatprep.subr.mxu0 0.0
    %76 = vmatpush1.msra.mxu0 0.0
    %77 = vmatprep.subr.mxu0 0.0
    %78 = vmatpush1.msra.mxu0 0.0
    %79 = vmatprep.subr.mxu0 0.0
    %80 = vmatpush1.msra.mxu0 %v32
    %81 = vmatprep.subr.mxu0 0.0
    %82 = vmatpush1.msra.mxu0 %v31
    %83 = vmatprep.subr.mxu0 0.0
    %84 = vmatpush1.msra.mxu0 %v30
    %85 = vmatprep.subr.mxu0 0.0
    %86 = vmatpush1.msra.mxu0 %v29
    %87 = vmatprep.subr.mxu0 0.0
    %88 = vmatpush1.msra.mxu0 %v28
    %89 = vmatprep.subr.mxu0 0.0
    %90 = vmatpush1.msra.mxu0 %v27
    %91 = vmatprep.subr.mxu0 0.0
    %92 = vmatpush1.msra.mxu0 %v26
    %93 = vmatprep.subr.mxu0 0.0
    %94 = vmatpush1.msra.mxu0 %v25
    %95 = vmatprep.subr.mxu0 0.0
    %96 = vmatpush2.msra.mxu0 0.0
    %97 = vmatprep.subr.mxu0 0.0
    %98 = vmatpush2.msra.mxu0 0.0
    %99 = vmatprep.subr.mxu0 0.0
    %100 = vmatpush2.msra.mxu0 0.0
    %101 = vmatprep.subr.mxu0 0.0
    %102 = vmatpush2.msra.mxu0 0.0
    %103 = vmatprep.subr.mxu0 0.0
    %104 = vmatpush2.msra.mxu0 0.0
    %105 = vmatprep.subr.mxu0 0.0
    %106 = vmatpush2.msra.mxu0 0.0
    %107 = vmatprep.subr.mxu0 0.0
    %108 = vmatpush2.msra.mxu0 0.0
    %109 = vmatprep.subr.mxu0 0.0
    %110 = vmatpush2.msra.mxu0 0.0
    %111 = vmatprep.subr.mxu0 0.0
    %112 = vmatpush2.msra.mxu0 0.0
    %113 = vmatprep.subr.mxu0 0.0
    %114 = vmatpush2.msra.mxu0 0.0
    %115 = vmatprep.subr.mxu0 0.0
    %116 = vmatpush2.msra.mxu0 0.0
    %117 = vmatprep.subr.mxu0 0.0
    %118 = vmatpush2.msra.mxu0 0.0
    %119 = vmatprep.subr.mxu0 0.0
    %120 = vmatpush2.msra.mxu0 0.0
    %121 = vmatprep.subr.mxu0 0.0
    %122 = vmatpush2.msra.mxu0 0.0
    %123 = vmatprep.subr.mxu0 0.0
    %124 = vmatpush2.msra.mxu0 0.0
    %125 = vmatprep.subr.mxu0 0.0
    %126 = vmatpush2.msra.mxu0 0.0
    %127 = vmatprep.mubr.f32.mxu0 0.0
    %128 = vmatmul.mubr.f32.gmra.mxu0 %v40
    %v129 = vpop.f32.mrf.mxu0
    %v130 = vadd.f32 %v37, %v129
    %v131 = vpop.f32.mrf.mxu0
    %132 = vmatprep.mubr.f32.mxu0 0.0
    %133 = vmatmul.mubr.f32.gmra.mxu0 %v43
    %v134 = vpop.f32.mrf.mxu0
    %v135 = vadd.f32 %v37, %v134
    %v136 = vpop.f32.mrf.mxu0
    %137 = vmatprep.mubr.f32.mxu0 0.0
    %138 = vmatmul.mubr.f32.gmra.mxu0 %v46
    %v139 = vpop.f32.mrf.mxu0
    %v140 = vadd.f32 %v37, %v139
    %v141 = vpop.f32.mrf.mxu0
    %142 = vmatprep.mubr.f32.mxu0 0.0
    %143 = vmatmul.mubr.f32.gmra.mxu0 %v49
    %v144 = vpop.f32.mrf.mxu0
    %v145 = vadd.f32 %v37, %v144
    %v146 = vpop.f32.mrf.mxu0
    %147 = vmatprep.mubr.f32.mxu0 0.0
    %148 = vmatmul.mubr.f32.gmra.mxu0 %v52
    %v149 = vpop.f32.mrf.mxu0
    %v150 = vadd.f32 %v37, %v149
    %v151 = vpop.f32.mrf.mxu0
    %152 = vmatprep.mubr.f32.mxu0 0.0
    %153 = vmatmul.mubr.f32.gmra.mxu0 %v55
    %v154 = vpop.f32.mrf.mxu0
    %v155 = vadd.f32 %v37, %v154
    %v156 = vpop.f32.mrf.mxu0
    %157 = vmatprep.mubr.f32.mxu0 0.0
    %158 = vmatmul.mubr.f32.gmra.mxu0 %v58
    %v159 = vpop.f32.mrf.mxu0
    %v160 = vadd.f32 %v37, %v159
    %v161 = vpop.f32.mrf.mxu0
    %162 = vmatprep.mubr.f32.mxu0 0.0
    %163 = vmatmul.mubr.f32.gmra.mxu0 %v61
    %v164 = vpop.f32.mrf.mxu0
    %v165 = vadd.f32 %v37, %v164
    %v166 = vpop.f32.mrf.mxu0
    %167 = vdwg.mxu0
    %v168 = vmax.f32 %v130, 0.0
    %v169 = vmax.f32 %v135, 0.0
    %v170 = vmax.f32 %v140, 0.0
    %v171 = vmax.f32 %v145, 0.0
    %v172 = vmax.f32 %v150, 0.0
    %v173 = vmax.f32 %v155, 0.0
    %v174 = vmax.f32 %v160, 0.0
    %v175 = vmax.f32 %v165, 0.0
    %v176 = vmul.f32 %v168, %v168
    %v177 = vmul.f32 %v169, %v169
    %v178 = vmul.f32 %v170, %v170
    %v179 = vmul.f32 %v171, %v171
    %v180 = vmul.f32 %v172, %v172
    %v181 = vmul.f32 %v173, %v173
    %v182 = vmul.f32 %v174, %v174
    %v183 = vmul.f32 %v175, %v175
    %vm184 = vcmask 261120
    %v185 = vsel %vm184, %v176, 0.0
    %186 = vadd.xlane.f32.xlu0 %v185
    %v187 = vpop.xlane.xlu0 %186
    %v188 = vsel %vm184, %v177, 0.0
    %189 = vadd.xlane.f32.xlu0 %v188
    %v190 = vpop.xlane.xlu0 %189
    %v191 = vsel %vm184, %v178, 0.0
    %192 = vadd.xlane.f32.xlu0 %v191
    %v193 = vpop.xlane.xlu0 %192
    %v194 = vsel %vm184, %v179, 0.0
    %195 = vadd.xlane.f32.xlu0 %v194
    %v196 = vpop.xlane.xlu0 %195
    %v197 = vsel %vm184, %v180, 0.0
    %198 = vadd.xlane.f32.xlu0 %v197
    %v199 = vpop.xlane.xlu0 %198
    %v200 = vsel %vm184, %v181, 0.0
    %201 = vadd.xlane.f32.xlu0 %v200
    %v202 = vpop.xlane.xlu0 %201
    %v203 = vsel %vm184, %v182, 0.0
    %204 = vadd.xlane.f32.xlu0 %v203
    %v205 = vpop.xlane.xlu0 %204
    %v206 = vsel %vm184, %v183, 0.0
    %207 = vadd.xlane.f32.xlu0 %v206
    %v208 = vpop.xlane.xlu0 %207
    %v209 = vrsqrt.pop %v187
    %v210 = vmul.f32 %v187, %v209
    %vm211 = vcmp.eq.f32.partialorder %v187, inf
    %v212 = vsel %vm211, %v187, %v210
    %vm213 = vcmp.eq.f32.partialorder %v187, 0.0
    %v214 = vand.u32 %v187, 2147483648
    %v215 = vsel %vm213, %v214, %v212
    %v216 = vrsqrt.pop %v190
    %v217 = vmul.f32 %v190, %v216
    %vm218 = vcmp.eq.f32.partialorder %v190, inf
    %v219 = vsel %vm218, %v190, %v217
    %vm220 = vcmp.eq.f32.partialorder %v190, 0.0
    %v221 = vand.u32 %v190, 2147483648
    %v222 = vsel %vm220, %v221, %v219
    %v223 = vrsqrt.pop %v193
    %v224 = vmul.f32 %v193, %v223
    %vm225 = vcmp.eq.f32.partialorder %v193, inf
    %v226 = vsel %vm225, %v193, %v224
    %vm227 = vcmp.eq.f32.partialorder %v193, 0.0
    %v228 = vand.u32 %v193, 2147483648
    %v229 = vsel %vm227, %v228, %v226
    %v230 = vrsqrt.pop %v196
    %v231 = vmul.f32 %v196, %v230
    %vm232 = vcmp.eq.f32.partialorder %v196, inf
    %v233 = vsel %vm232, %v196, %v231
    %vm234 = vcmp.eq.f32.partialorder %v196, 0.0
    %v235 = vand.u32 %v196, 2147483648
    %v236 = vsel %vm234, %v235, %v233
    %v237 = vrsqrt.pop %v199
    %v238 = vmul.f32 %v199, %v237
    %vm239 = vcmp.eq.f32.partialorder %v199, inf
    %v240 = vsel %vm239, %v199, %v238
    %vm241 = vcmp.eq.f32.partialorder %v199, 0.0
    %v242 = vand.u32 %v199, 2147483648
    %v243 = vsel %vm241, %v242, %v240
    %v244 = vrsqrt.pop %v202
    %v245 = vmul.f32 %v202, %v244
    %vm246 = vcmp.eq.f32.partialorder %v202, inf
    %v247 = vsel %vm246, %v202, %v245
    %vm248 = vcmp.eq.f32.partialorder %v202, 0.0
    %v249 = vand.u32 %v202, 2147483648
    %v250 = vsel %vm248, %v249, %v247
    %v251 = vrsqrt.pop %v205
    %v252 = vmul.f32 %v205, %v251
    %vm253 = vcmp.eq.f32.partialorder %v205, inf
    %v254 = vsel %vm253, %v205, %v252
    %vm255 = vcmp.eq.f32.partialorder %v205, 0.0
    %v256 = vand.u32 %v205, 2147483648
    %v257 = vsel %vm255, %v256, %v254
    %v258 = vrsqrt.pop %v208
    %v259 = vmul.f32 %v208, %v258
    %vm260 = vcmp.eq.f32.partialorder %v208, inf
    %v261 = vsel %vm260, %v208, %v259
    %vm262 = vcmp.eq.f32.partialorder %v208, 0.0
    %v263 = vand.u32 %v208, 2147483648
    %v264 = vsel %vm262, %v263, %v261
    %v265 = vadd.f32 %v215, 1e-06
    %v266 = vadd.f32 %v222, 1e-06
    %v267 = vadd.f32 %v229, 1e-06
    %v268 = vadd.f32 %v236, 1e-06
    %v269 = vadd.f32 %v243, 1e-06
    %v270 = vadd.f32 %v250, 1e-06
    %v271 = vadd.f32 %v257, 1e-06
    %v272 = vadd.f32 %v264, 1e-06
    %v273 = vrcp.pop %v265
    %v274 = vmul.f32 %v168, %v273
    %v275 = vrcp.pop %v266
    %v276 = vmul.f32 %v169, %v275
    %v277 = vrcp.pop %v267
    %v278 = vmul.f32 %v170, %v277
    %v279 = vrcp.pop %v268
    %v280 = vmul.f32 %v171, %v279
    %v281 = vrcp.pop %v269
    %v282 = vmul.f32 %v172, %v281
    %v283 = vrcp.pop %v270
    %v284 = vmul.f32 %v173, %v283
    %v285 = vrcp.pop %v271
    %v286 = vmul.f32 %v174, %v285
    %v287 = vrcp.pop %v272
    %v288 = vmul.f32 %v175, %v287
    %v290 = vsel %vm184, %v282, 0
    %v293 = vsel %vm184, %v284, 0
    %v296 = vsel %vm184, %v286, 0
    %v299 = vsel %vm184, %v288, 0
    %v302 = vsel %vm184, %v274, 0
    %v305 = vsel %vm184, %v276, 0
    %v308 = vsel %vm184, %v278, 0
    %v311 = vsel %vm184, %v280, 0
    %313 = vmatprep.subr.mxu0 0.0
    %314 = vmatpush1.xpose.msra.mxu0 0.0
    %315 = vmatprep.subr.mxu0 0.0
    %316 = vmatpush1.xpose.msra.mxu0 0.0
    %317 = vmatprep.subr.mxu0 0.0
    %318 = vmatpush1.xpose.msra.mxu0 0.0
    %319 = vmatprep.subr.mxu0 0.0
    %320 = vmatpush1.xpose.msra.mxu0 0.0
    %321 = vmatprep.subr.mxu0 0.0
    %322 = vmatpush1.xpose.msra.mxu0 0.0
    %323 = vmatprep.subr.mxu0 0.0
    %324 = vmatpush1.xpose.msra.mxu0 0.0
    %325 = vmatprep.subr.mxu0 0.0
    %326 = vmatpush1.xpose.msra.mxu0 0.0
    %327 = vmatprep.subr.mxu0 0.0
    %328 = vmatpush1.xpose.msra.mxu0 0.0
    %329 = vmatprep.subr.mxu0 0.0
    %330 = vmatpush1.xpose.msra.mxu0 0.0
    %331 = vmatprep.subr.mxu0 0.0
    %332 = vmatpush1.xpose.msra.mxu0 0.0
    %333 = vmatprep.subr.mxu0 0.0
    %334 = vmatpush1.xpose.msra.mxu0 0.0
    %335 = vmatprep.subr.mxu0 0.0
    %336 = vmatpush1.xpose.msra.mxu0 0.0
    %337 = vmatprep.subr.mxu0 0.0
    %338 = vmatpush1.xpose.msra.mxu0 %v311
    %339 = vmatprep.subr.mxu0 0.0
    %340 = vmatpush1.xpose.msra.mxu0 %v308
    %341 = vmatprep.subr.mxu0 0.0
    %342 = vmatpush1.xpose.msra.mxu0 %v305
    %343 = vmatprep.subr.mxu0 0.0
    %344 = vmatpush1.xpose.msra.mxu0 %v302
    %345 = vmatprep.subr.mxu0 0.0
    %346 = vmatpush2.xpose.msra.mxu0 0.0
    %347 = vmatprep.subr.mxu0 0.0
    %348 = vmatpush2.xpose.msra.mxu0 0.0
    %349 = vmatprep.subr.mxu0 0.0
    %350 = vmatpush2.xpose.msra.mxu0 0.0
    %351 = vmatprep.subr.mxu0 0.0
    %352 = vmatpush2.xpose.msra.mxu0 0.0
    %353 = vmatprep.subr.mxu0 0.0
    %354 = vmatpush2.xpose.msra.mxu0 0.0
    %355 = vmatprep.subr.mxu0 0.0
    %356 = vmatpush2.xpose.msra.mxu0 0.0
    %357 = vmatprep.subr.mxu0 0.0
    %358 = vmatpush2.xpose.msra.mxu0 0.0
    %359 = vmatprep.subr.mxu0 0.0
    %360 = vmatpush2.xpose.msra.mxu0 0.0
    %361 = vmatprep.subr.mxu0 0.0
    %362 = vmatpush2.xpose.msra.mxu0 0.0
    %363 = vmatprep.subr.mxu0 0.0
    %364 = vmatpush2.xpose.msra.mxu0 0.0
    %365 = vmatprep.subr.mxu0 0.0
    %366 = vmatpush2.xpose.msra.mxu0 0.0
    %367 = vmatprep.subr.mxu0 0.0
    %368 = vmatpush2.xpose.msra.mxu0 0.0
    %369 = vmatprep.subr.mxu0 0.0
    %370 = vmatpush2.xpose.msra.mxu0 0.0
    %371 = vmatprep.subr.mxu0 0.0
    %372 = vmatpush2.xpose.msra.mxu0 0.0
    %373 = vmatprep.subr.mxu0 0.0
    %374 = vmatpush2.xpose.msra.mxu0 0.0
    %375 = vmatprep.subr.mxu0 0.0
    %376 = vmatpush2.xpose.msra.mxu0 0.0
    %377 = vmatprep.mubr.f32.mxu0 0.0
    %378 = vmatmul.mubr.f32.gmra.mxu0 %v290
    %v379 = vpop.f32.mrf.mxu0
    %v380 = vadd.f32 0.0, %v379
    %v381 = vpop.f32.mrf.mxu0
    %382 = vmatprep.mubr.f32.mxu0 0.0
    %383 = vmatmul.mubr.f32.gmra.mxu0 %v293
    %v384 = vpop.f32.mrf.mxu0
    %v385 = vadd.f32 0.0, %v384
    %v386 = vpop.f32.mrf.mxu0
    %387 = vmatprep.mubr.f32.mxu0 0.0
    %388 = vmatmul.mubr.f32.gmra.mxu0 %v296
    %v389 = vpop.f32.mrf.mxu0
    %v390 = vadd.f32 0.0, %v389
    %v391 = vpop.f32.mrf.mxu0
    %392 = vmatprep.mubr.f32.mxu0 0.0
    %393 = vmatmul.mubr.f32.gmra.mxu0 %v299
    %v394 = vpop.f32.mrf.mxu0
    %v395 = vadd.f32 0.0, %v394
    %v396 = vpop.f32.mrf.mxu0
    %397 = vdwg.mxu0
    %v398 = vld [vmem:[%s1 + $0x120] sm:$0xff]
    %v399 = vld [vmem:[%s1 + $0x128] sm:$0xff]
    %v400 = vld [vmem:[%s1 + $0x130] sm:$0xff]
    %v401 = vld [vmem:[%s1 + $0x138] sm:$0xff]
    %v402 = vmul.f32 %v380, %v398
    %v403 = vmul.f32 %v385, %v399
    %v404 = vmul.f32 %v390, %v400
    %v405 = vmul.f32 %v395, %v401
    %v406 = vmax.f32 %v402, 0.0
    %v407 = vmax.f32 %v403, 0.0
    %v408 = vmax.f32 %v404, 0.0
    %v409 = vmax.f32 %v405, 0.0
    %v410 = vmul.f32 %v406, %v406
    %v411 = vmul.f32 %v407, %v407
    %v412 = vmul.f32 %v408, %v408
    %v413 = vmul.f32 %v409, %v409
    %v414 = vsel %vm184, %v410, 0.0
    %415 = vadd.xlane.f32.xlu0 %v414
    %v416 = vpop.xlane.xlu0 %415
    %v417 = vsel %vm184, %v411, 0.0
    %418 = vadd.xlane.f32.xlu0 %v417
    %v419 = vpop.xlane.xlu0 %418
    %v420 = vsel %vm184, %v412, 0.0
    %421 = vadd.xlane.f32.xlu0 %v420
    %v422 = vpop.xlane.xlu0 %421
    %v423 = vsel %vm184, %v413, 0.0
    %424 = vadd.xlane.f32.xlu0 %v423
    %v425 = vpop.xlane.xlu0 %424
    %v426 = vrsqrt.pop %v416
    %v427 = vmul.f32 %v416, %v426
    %vm428 = vcmp.eq.f32.partialorder %v416, inf
    %v429 = vsel %vm428, %v416, %v427
    %vm430 = vcmp.eq.f32.partialorder %v416, 0.0
    %v431 = vand.u32 %v416, 2147483648
    %v432 = vsel %vm430, %v431, %v429
    %v433 = vrsqrt.pop %v419
    %v434 = vmul.f32 %v419, %v433
    %vm435 = vcmp.eq.f32.partialorder %v419, inf
    %v436 = vsel %vm435, %v419, %v434
    %vm437 = vcmp.eq.f32.partialorder %v419, 0.0
    %v438 = vand.u32 %v419, 2147483648
    %v439 = vsel %vm437, %v438, %v436
    %v440 = vrsqrt.pop %v422
    %v441 = vmul.f32 %v422, %v440
    %vm442 = vcmp.eq.f32.partialorder %v422, inf
    %v443 = vsel %vm442, %v422, %v441
    %vm444 = vcmp.eq.f32.partialorder %v422, 0.0
    %v445 = vand.u32 %v422, 2147483648
    %v446 = vsel %vm444, %v445, %v443
    %v447 = vrsqrt.pop %v425
    %v448 = vmul.f32 %v425, %v447
    %vm449 = vcmp.eq.f32.partialorder %v425, inf
    %v450 = vsel %vm449, %v425, %v448
    %vm451 = vcmp.eq.f32.partialorder %v425, 0.0
    %v452 = vand.u32 %v425, 2147483648
    %v453 = vsel %vm451, %v452, %v450
    %v454 = vadd.f32 %v432, 1e-06
    %v455 = vadd.f32 %v439, 1e-06
    %v456 = vadd.f32 %v446, 1e-06
    %v457 = vadd.f32 %v453, 1e-06
    %v458 = vrcp.pop %v454
    %v459 = vmul.f32 %v406, %v458
    %v460 = vrcp.pop %v455
    %v461 = vmul.f32 %v407, %v460
    %v462 = vrcp.pop %v456
    %v463 = vmul.f32 %v408, %v462
    %v464 = vrcp.pop %v457
    %v465 = vmul.f32 %v409, %v464
    %v466 = vld [vmem:[%s1 + $0x158] sm:$0x1]
    %v467 = vld [vmem:[%s1 + $0x160] sm:$0x1]
    %469 = vset.pattern.permute.xlu0 0
    %470 = vperm.xlu0 %469, %v467
    %v471 = vpop.permute.xlu0 %470
    %v474 = vsel %vm184, %v466, 0
    %v477 = vsel %vm184, %v459, 0
    %v480 = vsel %vm184, %v461, 0
    %v483 = vsel %vm184, %v463, 0
    %v486 = vsel %vm184, %v465, 0
    %488 = vmatprep.subr.mxu0 0.0
    %489 = vmatpush1.xpose.msra.mxu0 0.0
    %490 = vmatprep.subr.mxu0 0.0
    %491 = vmatpush1.xpose.msra.mxu0 0.0
    %492 = vmatprep.subr.mxu0 0.0
    %493 = vmatpush1.xpose.msra.mxu0 0.0
    %494 = vmatprep.subr.mxu0 0.0
    %495 = vmatpush1.xpose.msra.mxu0 0.0
    %496 = vmatprep.subr.mxu0 0.0
    %497 = vmatpush1.xpose.msra.mxu0 0.0
    %498 = vmatprep.subr.mxu0 0.0
    %499 = vmatpush1.xpose.msra.mxu0 0.0
    %500 = vmatprep.subr.mxu0 0.0
    %501 = vmatpush1.xpose.msra.mxu0 0.0
    %502 = vmatprep.subr.mxu0 0.0
    %503 = vmatpush1.xpose.msra.mxu0 0.0
    %504 = vmatprep.subr.mxu0 0.0
    %505 = vmatpush1.xpose.msra.mxu0 0.0
    %506 = vmatprep.subr.mxu0 0.0
    %507 = vmatpush1.xpose.msra.mxu0 0.0
    %508 = vmatprep.subr.mxu0 0.0
    %509 = vmatpush1.xpose.msra.mxu0 0.0
    %510 = vmatprep.subr.mxu0 0.0
    %511 = vmatpush1.xpose.msra.mxu0 0.0
    %512 = vmatprep.subr.mxu0 0.0
    %513 = vmatpush1.xpose.msra.mxu0 %v486
    %514 = vmatprep.subr.mxu0 0.0
    %515 = vmatpush1.xpose.msra.mxu0 %v483
    %516 = vmatprep.subr.mxu0 0.0
    %517 = vmatpush1.xpose.msra.mxu0 %v480
    %518 = vmatprep.subr.mxu0 0.0
    %519 = vmatpush1.xpose.msra.mxu0 %v477
    %520 = vmatprep.subr.mxu0 0.0
    %521 = vmatpush2.xpose.msra.mxu0 0.0
    %522 = vmatprep.subr.mxu0 0.0
    %523 = vmatpush2.xpose.msra.mxu0 0.0
    %524 = vmatprep.subr.mxu0 0.0
    %525 = vmatpush2.xpose.msra.mxu0 0.0
    %526 = vmatprep.subr.mxu0 0.0
    %527 = vmatpush2.xpose.msra.mxu0 0.0
    %528 = vmatprep.subr.mxu0 0.0
    %529 = vmatpush2.xpose.msra.mxu0 0.0
    %530 = vmatprep.subr.mxu0 0.0
    %531 = vmatpush2.xpose.msra.mxu0 0.0
    %532 = vmatprep.subr.mxu0 0.0
    %533 = vmatpush2.xpose.msra.mxu0 0.0
    %534 = vmatprep.subr.mxu0 0.0
    %535 = vmatpush2.xpose.msra.mxu0 0.0
    %536 = vmatprep.subr.mxu0 0.0
    %537 = vmatpush2.xpose.msra.mxu0 0.0
    %538 = vmatprep.subr.mxu0 0.0
    %539 = vmatpush2.xpose.msra.mxu0 0.0
    %540 = vmatprep.subr.mxu0 0.0
    %541 = vmatpush2.xpose.msra.mxu0 0.0
    %542 = vmatprep.subr.mxu0 0.0
    %543 = vmatpush2.xpose.msra.mxu0 0.0
    %544 = vmatprep.subr.mxu0 0.0
    %545 = vmatpush2.xpose.msra.mxu0 0.0
    %546 = vmatprep.subr.mxu0 0.0
    %547 = vmatpush2.xpose.msra.mxu0 0.0
    %548 = vmatprep.subr.mxu0 0.0
    %549 = vmatpush2.xpose.msra.mxu0 0.0
    %550 = vmatprep.subr.mxu0 0.0
    %551 = vmatpush2.xpose.msra.mxu0 0.0
    %552 = vmatprep.mubr.f32.mxu0 0.0
    %553 = vmatmul.mubr.f32.gmra.mxu0 %v474
    %v554 = vpop.f32.mrf.mxu0
    %v555 = vadd.f32 %v471, %v554
    %v556 = vpop.f32.mrf.mxu0
    %557 = vdwg.mxu0
    %v558 = vsub.f32 0.0, %v555
    %v559 = vmul.f32 %v558, 1.442695
    %v560 = vpow.pop %v559
    %v561 = vadd.f32 %v560, 1.0
    %v562 = vrcp.pop %v561
    %v563 = vmul.f32 1.0, %v562
    %vm564 = vcmask 253952
    %565 = vst.msk [vmem:[%s3] sm:$0x1] %vm564, %v563
    %v566 = vld [vmem:[%s1 + $0x40] sm:$0xff]
    %v567 = vld [vmem:[%s1 + $0x48] sm:$0xff]
    %v568 = vld [vmem:[%s1 + $0x50] sm:$0xff]
    %v569 = vld [vmem:[%s1 + $0x58] sm:$0xff]
    %v570 = vld [vmem:[%s1 + $0x60] sm:$0xff]
    %v571 = vld [vmem:[%s1 + $0x68] sm:$0xff]
    %v572 = vld [vmem:[%s1 + $0x70] sm:$0xff]
    %v573 = vld [vmem:[%s1 + $0x78] sm:$0xff]
    %v574 = vld [vmem:[%s1 + $0x80] sm:$0xff]
    %v575 = vld [vmem:[%s1 + $0x88] sm:$0xff]
    %v576 = vld [vmem:[%s1 + $0x90] sm:$0xff]
    %v577 = vld [vmem:[%s1 + $0x98] sm:$0xff]
    %v578 = vld [vmem:[%s1 + $0xa0] sm:$0xff]
    %v579 = vld [vmem:[%s1 + $0xa8] sm:$0xff]
    %v580 = vld [vmem:[%s1 + $0xb0] sm:$0xff]
    %v581 = vld [vmem:[%s1 + $0xb8] sm:$0xff]
    %v582 = vld [vmem:[%s1 + $0x150] sm:$0x1]
    %583 = vmatprep.subr.mxu0 0.0
    %584 = vmatpush1.msra.mxu0 0.0
    %585 = vmatprep.subr.mxu0 0.0
    %586 = vmatpush1.msra.mxu0 0.0
    %587 = vmatprep.subr.mxu0 0.0
    %588 = vmatpush1.msra.mxu0 0.0
    %589 = vmatprep.subr.mxu0 0.0
    %590 = vmatpush1.msra.mxu0 0.0
    %591 = vmatprep.subr.mxu0 0.0
    %592 = vmatpush1.msra.mxu0 0.0
    %593 = vmatprep.subr.mxu0 0.0
    %594 = vmatpush1.msra.mxu0 0.0
    %595 = vmatprep.subr.mxu0 0.0
    %596 = vmatpush1.msra.mxu0 0.0
    %597 = vmatprep.subr.mxu0 0.0
    %598 = vmatpush1.msra.mxu0 0.0
    %599 = vmatprep.subr.mxu0 0.0
    %600 = vmatpush1.msra.mxu0 %v581
    %601 = vmatprep.subr.mxu0 0.0
    %602 = vmatpush1.msra.mxu0 %v580
    %603 = vmatprep.subr.mxu0 0.0
    %604 = vmatpush1.msra.mxu0 %v579
    %605 = vmatprep.subr.mxu0 0.0
    %606 = vmatpush1.msra.mxu0 %v578
    %607 = vmatprep.subr.mxu0 0.0
    %608 = vmatpush1.msra.mxu0 %v577
    %609 = vmatprep.subr.mxu0 0.0
    %610 = vmatpush1.msra.mxu0 %v576
    %611 = vmatprep.subr.mxu0 0.0
    %612 = vmatpush1.msra.mxu0 %v575
    %613 = vmatprep.subr.mxu0 0.0
    %614 = vmatpush1.msra.mxu0 %v574
    %615 = vmatprep.subr.mxu0 0.0
    %616 = vmatpush2.msra.mxu0 0.0
    %617 = vmatprep.subr.mxu0 0.0
    %618 = vmatpush2.msra.mxu0 0.0
    %619 = vmatprep.subr.mxu0 0.0
    %620 = vmatpush2.msra.mxu0 0.0
    %621 = vmatprep.subr.mxu0 0.0
    %622 = vmatpush2.msra.mxu0 0.0
    %623 = vmatprep.subr.mxu0 0.0
    %624 = vmatpush2.msra.mxu0 0.0
    %625 = vmatprep.subr.mxu0 0.0
    %626 = vmatpush2.msra.mxu0 0.0
    %627 = vmatprep.subr.mxu0 0.0
    %628 = vmatpush2.msra.mxu0 0.0
    %629 = vmatprep.subr.mxu0 0.0
    %630 = vmatpush2.msra.mxu0 0.0
    %631 = vmatprep.subr.mxu0 0.0
    %632 = vmatpush2.msra.mxu0 0.0
    %633 = vmatprep.subr.mxu0 0.0
    %634 = vmatpush2.msra.mxu0 0.0
    %635 = vmatprep.subr.mxu0 0.0
    %636 = vmatpush2.msra.mxu0 0.0
    %637 = vmatprep.subr.mxu0 0.0
    %638 = vmatpush2.msra.mxu0 0.0
    %639 = vmatprep.subr.mxu0 0.0
    %640 = vmatpush2.msra.mxu0 0.0
    %641 = vmatprep.subr.mxu0 0.0
    %642 = vmatpush2.msra.mxu0 0.0
    %643 = vmatprep.subr.mxu0 0.0
    %644 = vmatpush2.msra.mxu0 0.0
    %645 = vmatprep.subr.mxu0 0.0
    %646 = vmatpush2.msra.mxu0 0.0
    %647 = vmatprep.mubr.f32.mxu0 0.0
    %648 = vmatmul.mubr.f32.gmra.mxu0 %v52
    %v649 = vpop.f32.mrf.mxu0
    %v650 = vadd.f32 0.0, %v649
    %v651 = vpop.f32.mrf.mxu0
    %652 = vmatprep.mubr.f32.mxu0 0.0
    %653 = vmatmul.mubr.f32.gmra.mxu0 %v55
    %v654 = vpop.f32.mrf.mxu0
    %v655 = vadd.f32 0.0, %v654
    %v656 = vpop.f32.mrf.mxu0
    %657 = vmatprep.mubr.f32.mxu0 0.0
    %658 = vmatmul.mubr.f32.gmra.mxu0 %v58
    %v659 = vpop.f32.mrf.mxu0
    %v660 = vadd.f32 0.0, %v659
    %v661 = vpop.f32.mrf.mxu0
    %662 = vmatprep.mubr.f32.mxu0 0.0
    %663 = vmatmul.mubr.f32.gmra.mxu0 %v61
    %v664 = vpop.f32.mrf.mxu0
    %v665 = vadd.f32 0.0, %v664
    %v666 = vpop.f32.mrf.mxu0
    %667 = vdwg.mxu0
    %668 = vmatprep.subr.mxu0 0.0
    %669 = vmatpush1.msra.mxu0 0.0
    %670 = vmatprep.subr.mxu0 0.0
    %671 = vmatpush1.msra.mxu0 0.0
    %672 = vmatprep.subr.mxu0 0.0
    %673 = vmatpush1.msra.mxu0 0.0
    %674 = vmatprep.subr.mxu0 0.0
    %675 = vmatpush1.msra.mxu0 0.0
    %676 = vmatprep.subr.mxu0 0.0
    %677 = vmatpush1.msra.mxu0 0.0
    %678 = vmatprep.subr.mxu0 0.0
    %679 = vmatpush1.msra.mxu0 0.0
    %680 = vmatprep.subr.mxu0 0.0
    %681 = vmatpush1.msra.mxu0 0.0
    %682 = vmatprep.subr.mxu0 0.0
    %683 = vmatpush1.msra.mxu0 0.0
    %684 = vmatprep.subr.mxu0 0.0
    %685 = vmatpush1.msra.mxu0 %v573
    %686 = vmatprep.subr.mxu0 0.0
    %687 = vmatpush1.msra.mxu0 %v572
    %688 = vmatprep.subr.mxu0 0.0
    %689 = vmatpush1.msra.mxu0 %v571
    %690 = vmatprep.subr.mxu0 0.0
    %691 = vmatpush1.msra.mxu0 %v570
    %692 = vmatprep.subr.mxu0 0.0
    %693 = vmatpush1.msra.mxu0 %v569
    %694 = vmatprep.subr.mxu0 0.0
    %695 = vmatpush1.msra.mxu0 %v568
    %696 = vmatprep.subr.mxu0 0.0
    %697 = vmatpush1.msra.mxu0 %v567
    %698 = vmatprep.subr.mxu0 0.0
    %699 = vmatpush1.msra.mxu0 %v566
    %700 = vmatprep.subr.mxu0 0.0
    %701 = vmatpush2.msra.mxu0 0.0
    %702 = vmatprep.subr.mxu0 0.0
    %703 = vmatpush2.msra.mxu0 0.0
    %704 = vmatprep.subr.mxu0 0.0
    %705 = vmatpush2.msra.mxu0 0.0
    %706 = vmatprep.subr.mxu0 0.0
    %707 = vmatpush2.msra.mxu0 0.0
    %708 = vmatprep.subr.mxu0 0.0
    %709 = vmatpush2.msra.mxu0 0.0
    %710 = vmatprep.subr.mxu0 0.0
    %711 = vmatpush2.msra.mxu0 0.0
    %712 = vmatprep.subr.mxu0 0.0
    %713 = vmatpush2.msra.mxu0 0.0
    %714 = vmatprep.subr.mxu0 0.0
    %715 = vmatpush2.msra.mxu0 0.0
    %716 = vmatprep.subr.mxu0 0.0
    %717 = vmatpush2.msra.mxu0 0.0
    %718 = vmatprep.subr.mxu0 0.0
    %719 = vmatpush2.msra.mxu0 0.0
    %720 = vmatprep.subr.mxu0 0.0
    %721 = vmatpush2.msra.mxu0 0.0
    %722 = vmatprep.subr.mxu0 0.0
    %723 = vmatpush2.msra.mxu0 0.0
    %724 = vmatprep.subr.mxu0 0.0
    %725 = vmatpush2.msra.mxu0 0.0
    %726 = vmatprep.subr.mxu0 0.0
    %727 = vmatpush2.msra.mxu0 0.0
    %728 = vmatprep.subr.mxu0 0.0
    %729 = vmatpush2.msra.mxu0 0.0
    %730 = vmatprep.subr.mxu0 0.0
    %731 = vmatpush2.msra.mxu0 0.0
    %732 = vmatprep.mubr.f32.mxu0 0.0
    %733 = vmatmul.mubr.f32.gmra.mxu0 %v40
    %v734 = vpop.f32.mrf.mxu0
    %v735 = vadd.f32 %v650, %v734
    %v736 = vpop.f32.mrf.mxu0
    %737 = vmatprep.mubr.f32.mxu0 0.0
    %738 = vmatmul.mubr.f32.gmra.mxu0 %v43
    %v739 = vpop.f32.mrf.mxu0
    %v740 = vadd.f32 %v655, %v739
    %v741 = vpop.f32.mrf.mxu0
    %742 = vmatprep.mubr.f32.mxu0 0.0
    %743 = vmatmul.mubr.f32.gmra.mxu0 %v46
    %v744 = vpop.f32.mrf.mxu0
    %v745 = vadd.f32 %v660, %v744
    %v746 = vpop.f32.mrf.mxu0
    %747 = vmatprep.mubr.f32.mxu0 0.0
    %748 = vmatmul.mubr.f32.gmra.mxu0 %v49
    %v749 = vpop.f32.mrf.mxu0
    %v750 = vadd.f32 %v665, %v749
    %v751 = vpop.f32.mrf.mxu0
    %752 = vdwg.mxu0
    %v753 = vlaneseq
    %v754 = vshrl.u32 %v753, 7
    %v755 = vsub.s32 0, %v754
    %v756 = vrot.slane %v582, %v755
    %v757 = vadd.f32 %v735, %v756
    %v758 = vadd.f32 %v740, %v756
    %v759 = vadd.f32 %v745, %v756
    %v760 = vadd.f32 %v750, %v756
    %v761 = vmax.f32 %v757, 0.0
    %v762 = vmax.f32 %v758, 0.0
    %v763 = vmax.f32 %v759, 0.0
    %v764 = vmax.f32 %v760, 0.0
    %v765 = vld [vmem:[%s2] sm:$0xff]
    %v766 = vld [vmem:[%s2 + $0x8] sm:$0xff]
    %v767 = vld [vmem:[%s2 + $0x10] sm:$0xff]
    %v768 = vld [vmem:[%s2 + $0x18] sm:$0xff]
    %v769 = vld [vmem:[%s2 + $0x20] sm:$0xff]
    %v770 = vld [vmem:[%s2 + $0x28] sm:$0xff]
    %v771 = vld [vmem:[%s2 + $0x30] sm:$0xff]
    %v772 = vld [vmem:[%s2 + $0x38] sm:$0xff]
    %v774 = vsel %vm184, %v761, 0
    %v777 = vsel %vm184, %v762, 0
    %v780 = vsel %vm184, %v763, 0
    %v783 = vsel %vm184, %v764, 0
    %785 = vmatprep.subr.mxu0 0.0
    %786 = vmatpush1.msra.mxu0 0.0
    %787 = vmatprep.subr.mxu0 0.0
    %788 = vmatpush1.msra.mxu0 0.0
    %789 = vmatprep.subr.mxu0 0.0
    %790 = vmatpush1.msra.mxu0 0.0
    %791 = vmatprep.subr.mxu0 0.0
    %792 = vmatpush1.msra.mxu0 0.0
    %793 = vmatprep.subr.mxu0 0.0
    %794 = vmatpush1.msra.mxu0 0.0
    %795 = vmatprep.subr.mxu0 0.0
    %796 = vmatpush1.msra.mxu0 0.0
    %797 = vmatprep.subr.mxu0 0.0
    %798 = vmatpush1.msra.mxu0 0.0
    %799 = vmatprep.subr.mxu0 0.0
    %800 = vmatpush1.msra.mxu0 0.0
    %801 = vmatprep.subr.mxu0 0.0
    %802 = vmatpush1.msra.mxu0 0.0
    %803 = vmatprep.subr.mxu0 0.0
    %804 = vmatpush1.msra.mxu0 0.0
    %805 = vmatprep.subr.mxu0 0.0
    %806 = vmatpush1.msra.mxu0 0.0
    %807 = vmatprep.subr.mxu0 0.0
    %808 = vmatpush1.msra.mxu0 0.0
    %809 = vmatprep.subr.mxu0 0.0
    %810 = vmatpush1.msra.mxu0 %v768
    %811 = vmatprep.subr.mxu0 0.0
    %812 = vmatpush1.msra.mxu0 %v767
    %813 = vmatprep.subr.mxu0 0.0
    %814 = vmatpush1.msra.mxu0 %v766
    %815 = vmatprep.subr.mxu0 0.0
    %816 = vmatpush1.msra.mxu0 %v765
    %817 = vmatprep.subr.mxu0 0.0
    %818 = vmatpush2.msra.mxu0 0.0
    %819 = vmatprep.subr.mxu0 0.0
    %820 = vmatpush2.msra.mxu0 0.0
    %821 = vmatprep.subr.mxu0 0.0
    %822 = vmatpush2.msra.mxu0 0.0
    %823 = vmatprep.subr.mxu0 0.0
    %824 = vmatpush2.msra.mxu0 0.0
    %825 = vmatprep.subr.mxu0 0.0
    %826 = vmatpush2.msra.mxu0 0.0
    %827 = vmatprep.subr.mxu0 0.0
    %828 = vmatpush2.msra.mxu0 0.0
    %829 = vmatprep.subr.mxu0 0.0
    %830 = vmatpush2.msra.mxu0 0.0
    %831 = vmatprep.subr.mxu0 0.0
    %832 = vmatpush2.msra.mxu0 0.0
    %833 = vmatprep.subr.mxu0 0.0
    %834 = vmatpush2.msra.mxu0 0.0
    %835 = vmatprep.subr.mxu0 0.0
    %836 = vmatpush2.msra.mxu0 0.0
    %837 = vmatprep.subr.mxu0 0.0
    %838 = vmatpush2.msra.mxu0 0.0
    %839 = vmatprep.subr.mxu0 0.0
    %840 = vmatpush2.msra.mxu0 0.0
    %841 = vmatprep.subr.mxu0 0.0
    %842 = vmatpush2.msra.mxu0 0.0
    %843 = vmatprep.subr.mxu0 0.0
    %844 = vmatpush2.msra.mxu0 0.0
    %845 = vmatprep.subr.mxu0 0.0
    %846 = vmatpush2.msra.mxu0 0.0
    %847 = vmatprep.subr.mxu0 0.0
    %848 = vmatpush2.msra.mxu0 0.0
    %849 = vmatprep.mubr.f32.mxu0 0.0
    %850 = vmatmul.mubr.f32.gmra.mxu0 %v774
    %v851 = vpop.f32.mrf.mxu0
    %v852 = vadd.f32 0.0, %v851
    %v853 = vpop.f32.mrf.mxu0
    %854 = vmatprep.mubr.f32.mxu0 0.0
    %855 = vmatmul.mubr.f32.gmra.mxu0 %v777
    %v856 = vpop.f32.mrf.mxu0
    %v857 = vadd.f32 0.0, %v856
    %v858 = vpop.f32.mrf.mxu0
    %859 = vmatprep.mubr.f32.mxu0 0.0
    %860 = vmatmul.mubr.f32.gmra.mxu0 %v780
    %v861 = vpop.f32.mrf.mxu0
    %v862 = vadd.f32 0.0, %v861
    %v863 = vpop.f32.mrf.mxu0
    %864 = vmatprep.mubr.f32.mxu0 0.0
    %865 = vmatmul.mubr.f32.gmra.mxu0 %v783
    %v866 = vpop.f32.mrf.mxu0
    %v867 = vadd.f32 0.0, %v866
    %v868 = vpop.f32.mrf.mxu0
    %869 = vdwg.mxu0
    %v870 = vld [vmem:[%s1 + $0xc0] sm:$0xff]
    %v871 = vld [vmem:[%s1 + $0xc8] sm:$0xff]
    %v872 = vld [vmem:[%s1 + $0xd0] sm:$0xff]
    %v873 = vld [vmem:[%s1 + $0xd8] sm:$0xff]
    %v874 = vld [vmem:[%s1 + $0xe0] sm:$0xff]
    %v875 = vld [vmem:[%s1 + $0xe8] sm:$0xff]
    %v876 = vld [vmem:[%s1 + $0xf0] sm:$0xff]
    %v877 = vld [vmem:[%s1 + $0xf8] sm:$0xff]
    %v878 = vld [vmem:[%s1 + $0x100] sm:$0xff]
    %v879 = vld [vmem:[%s1 + $0x108] sm:$0xff]
    %v880 = vld [vmem:[%s1 + $0x110] sm:$0xff]
    %v881 = vld [vmem:[%s1 + $0x118] sm:$0xff]
    %v882 = vmul.f32 %v852, %v769
    %v883 = vmul.f32 %v857, %v770
    %v884 = vmul.f32 %v862, %v771
    %v885 = vmul.f32 %v867, %v772
    %vm886 = vcmask 785408
    %v888 = vsel %vm886, %v882, 0
    %v891 = vsel %vm886, %v883, 0
    %v894 = vsel %vm886, %v884, 0
    %v897 = vsel %vm886, %v885, 0
    %899 = vmatprep.subr.mxu0 0.0
    %900 = vmatpush1.msra.mxu0 0.0
    %901 = vmatprep.subr.mxu0 0.0
    %902 = vmatpush1.msra.mxu0 0.0
    %903 = vmatprep.subr.mxu0 0.0
    %904 = vmatpush1.msra.mxu0 0.0
    %905 = vmatprep.subr.mxu0 0.0
    %906 = vmatpush1.msra.mxu0 0.0
    %907 = vmatprep.subr.mxu0 0.0
    %908 = vmatpush1.msra.mxu0 %v881
    %909 = vmatprep.subr.mxu0 0.0
    %910 = vmatpush1.msra.mxu0 %v880
    %911 = vmatprep.subr.mxu0 0.0
    %912 = vmatpush1.msra.mxu0 %v879
    %913 = vmatprep.subr.mxu0 0.0
    %914 = vmatpush1.msra.mxu0 %v878
    %915 = vmatprep.subr.mxu0 0.0
    %916 = vmatpush1.msra.mxu0 %v877
    %917 = vmatprep.subr.mxu0 0.0
    %918 = vmatpush1.msra.mxu0 %v876
    %919 = vmatprep.subr.mxu0 0.0
    %920 = vmatpush1.msra.mxu0 %v875
    %921 = vmatprep.subr.mxu0 0.0
    %922 = vmatpush1.msra.mxu0 %v874
    %923 = vmatprep.subr.mxu0 0.0
    %924 = vmatpush1.msra.mxu0 %v873
    %925 = vmatprep.subr.mxu0 0.0
    %926 = vmatpush1.msra.mxu0 %v872
    %927 = vmatprep.subr.mxu0 0.0
    %928 = vmatpush1.msra.mxu0 %v871
    %929 = vmatprep.subr.mxu0 0.0
    %930 = vmatpush1.msra.mxu0 %v870
    %931 = vmatprep.subr.mxu0 0.0
    %932 = vmatpush2.msra.mxu0 0.0
    %933 = vmatprep.subr.mxu0 0.0
    %934 = vmatpush2.msra.mxu0 0.0
    %935 = vmatprep.subr.mxu0 0.0
    %936 = vmatpush2.msra.mxu0 0.0
    %937 = vmatprep.subr.mxu0 0.0
    %938 = vmatpush2.msra.mxu0 0.0
    %939 = vmatprep.subr.mxu0 0.0
    %940 = vmatpush2.msra.mxu0 0.0
    %941 = vmatprep.subr.mxu0 0.0
    %942 = vmatpush2.msra.mxu0 0.0
    %943 = vmatprep.subr.mxu0 0.0
    %944 = vmatpush2.msra.mxu0 0.0
    %945 = vmatprep.subr.mxu0 0.0
    %946 = vmatpush2.msra.mxu0 0.0
    %947 = vmatprep.subr.mxu0 0.0
    %948 = vmatpush2.msra.mxu0 0.0
    %949 = vmatprep.subr.mxu0 0.0
    %950 = vmatpush2.msra.mxu0 0.0
    %951 = vmatprep.subr.mxu0 0.0
    %952 = vmatpush2.msra.mxu0 0.0
    %953 = vmatprep.subr.mxu0 0.0
    %954 = vmatpush2.msra.mxu0 0.0
    %955 = vmatprep.subr.mxu0 0.0
    %956 = vmatpush2.msra.mxu0 0.0
    %957 = vmatprep.subr.mxu0 0.0
    %958 = vmatpush2.msra.mxu0 0.0
    %959 = vmatprep.subr.mxu0 0.0
    %960 = vmatpush2.msra.mxu0 0.0
    %961 = vmatprep.subr.mxu0 0.0
    %962 = vmatpush2.msra.mxu0 0.0
    %963 = vmatprep.mubr.f32.mxu0 0.0
    %964 = vmatmul.mubr.f32.gmra.mxu0 %v888
    %v965 = vpop.f32.mrf.mxu0
    %v966 = vadd.f32 0.0, %v965
    %v967 = vpop.f32.mrf.mxu0
    %968 = vmatprep.mubr.f32.mxu0 0.0
    %969 = vmatmul.mubr.f32.gmra.mxu0 %v891
    %v970 = vpop.f32.mrf.mxu0
    %v971 = vadd.f32 0.0, %v970
    %v972 = vpop.f32.mrf.mxu0
    %973 = vmatprep.mubr.f32.mxu0 0.0
    %974 = vmatmul.mubr.f32.gmra.mxu0 %v894
    %v975 = vpop.f32.mrf.mxu0
    %v976 = vadd.f32 0.0, %v975
    %v977 = vpop.f32.mrf.mxu0
    %978 = vmatprep.mubr.f32.mxu0 0.0
    %979 = vmatmul.mubr.f32.gmra.mxu0 %v897
    %v980 = vpop.f32.mrf.mxu0
    %v981 = vadd.f32 0.0, %v980
    %v982 = vpop.f32.mrf.mxu0
    %983 = vdwg.mxu0
    %v984 = vld [vmem:[%s1 + $0x140] sm:$0x3]
    %v985 = vld [vmem:[%s1 + $0x168] sm:$0x1]
    %v986 = vlaneseq
    %v987 = vshrl.u32 %v986, 7
    %v988 = vsub.s32 0, %v987
    %v989 = vrot.slane %v985, %v988
    %v991 = vsel %vm184, %v984, 0
    %993 = vmatprep.subr.mxu0 0.0
    %994 = vmatpush1.msra.mxu0 0.0
    %995 = vmatprep.subr.mxu0 0.0
    %996 = vmatpush1.msra.mxu0 0.0
    %997 = vmatprep.subr.mxu0 0.0
    %998 = vmatpush1.msra.mxu0 0.0
    %999 = vmatprep.subr.mxu0 0.0
    %1000 = vmatpush1.msra.mxu0 0.0
    %1001 = vmatprep.subr.mxu0 0.0
    %1002 = vmatpush1.msra.mxu0 0.0
    %1003 = vmatprep.subr.mxu0 0.0
    %1004 = vmatpush1.msra.mxu0 0.0
    %1005 = vmatprep.subr.mxu0 0.0
    %1006 = vmatpush1.msra.mxu0 0.0
    %1007 = vmatprep.subr.mxu0 0.0
    %1008 = vmatpush1.msra.mxu0 0.0
    %1009 = vmatprep.subr.mxu0 0.0
    %1010 = vmatpush1.msra.mxu0 0.0
    %1011 = vmatprep.subr.mxu0 0.0
    %1012 = vmatpush1.msra.mxu0 0.0
    %1013 = vmatprep.subr.mxu0 0.0
    %1014 = vmatpush1.msra.mxu0 0.0
    %1015 = vmatprep.subr.mxu0 0.0
    %1016 = vmatpush1.msra.mxu0 0.0
    %1017 = vmatprep.subr.mxu0 0.0
    %1018 = vmatpush1.msra.mxu0 %v981
    %1019 = vmatprep.subr.mxu0 0.0
    %1020 = vmatpush1.msra.mxu0 %v976
    %1021 = vmatprep.subr.mxu0 0.0
    %1022 = vmatpush1.msra.mxu0 %v971
    %1023 = vmatprep.subr.mxu0 0.0
    %1024 = vmatpush1.msra.mxu0 %v966
    %1025 = vmatprep.subr.mxu0 0.0
    %1026 = vmatpush2.msra.mxu0 0.0
    %1027 = vmatprep.subr.mxu0 0.0
    %1028 = vmatpush2.msra.mxu0 0.0
    %1029 = vmatprep.subr.mxu0 0.0
    %1030 = vmatpush2.msra.mxu0 0.0
    %1031 = vmatprep.subr.mxu0 0.0
    %1032 = vmatpush2.msra.mxu0 0.0
    %1033 = vmatprep.subr.mxu0 0.0
    %1034 = vmatpush2.msra.mxu0 0.0
    %1035 = vmatprep.subr.mxu0 0.0
    %1036 = vmatpush2.msra.mxu0 0.0
    %1037 = vmatprep.subr.mxu0 0.0
    %1038 = vmatpush2.msra.mxu0 0.0
    %1039 = vmatprep.subr.mxu0 0.0
    %1040 = vmatpush2.msra.mxu0 0.0
    %1041 = vmatprep.subr.mxu0 0.0
    %1042 = vmatpush2.msra.mxu0 0.0
    %1043 = vmatprep.subr.mxu0 0.0
    %1044 = vmatpush2.msra.mxu0 0.0
    %1045 = vmatprep.subr.mxu0 0.0
    %1046 = vmatpush2.msra.mxu0 0.0
    %1047 = vmatprep.subr.mxu0 0.0
    %1048 = vmatpush2.msra.mxu0 0.0
    %1049 = vmatprep.subr.mxu0 0.0
    %1050 = vmatpush2.msra.mxu0 0.0
    %1051 = vmatprep.subr.mxu0 0.0
    %1052 = vmatpush2.msra.mxu0 0.0
    %1053 = vmatprep.subr.mxu0 0.0
    %1054 = vmatpush2.msra.mxu0 0.0
    %1055 = vmatprep.subr.mxu0 0.0
    %1056 = vmatpush2.msra.mxu0 0.0
    %1057 = vmatprep.mubr.f32.mxu0 0.0
    %1058 = vmatmul.mubr.f32.gmra.mxu0 %v991
    %v1059 = vpop.f32.mrf.mxu0
    %v1060 = vadd.f32 %v989, %v1059
    %v1061 = vpop.f32.mrf.mxu0
    %1062 = vdwg.mxu0
    %vm1063 = vcmask 41984
    %1064 = vst.msk [vmem:[#allocation2] sm:$0x3] %vm1063, %v1060
    // Predicated region
    $region14: #{forward.1} parent=1 // pred_check
      _
    $region15: #{forward.1} parent=1 // pred_check_branch
      %1066 = sbr.rel (0) target = $region17
    $region16: #{forward.1} parent=1 // pred_region
      _
    $region17: #{forward.1} parent=1 // pred_fallthru
      _
    // Predicated region
    $region18: #{forward.1} parent=1 // pred_check
      _
    $region19: #{forward.1} parent=1 // pred_check_branch
      %1068 = sbr.rel (0) target = $region21
    $region20: #{forward.1} parent=1 // pred_region
      %s1070 = ssub.s32 32, 32
      %1071 = vsyncadd [#allocation3], %s1070
      %s1073 = sshll.u32 [#allocation2], 4
      %s1074 = int_to_ptr.vmem [resolvable:$true] %s1073
      %1076 = dma.vmem_to_hbm [thread:$0]  %s1074, 32, %s4, [#allocation3]
    $region21: #{forward.1} parent=1 // pred_fallthru
      _
    // Predicated region
    $region22: #{forward.1} parent=1 // pred_check
      _
    $region23: #{forward.1} parent=1 // pred_check_branch
      %1078 = sbr.rel (0) target = $region25
    $region24: #{forward.1} parent=1 // pred_region
      _
    $region25: #{forward.1} parent=1 // pred_fallthru
      _
    // Predicated region
    $region26: #{forward.1} parent=1 // pred_check
      _
    $region27: #{forward.1} parent=1 // pred_check_branch
      %1080 = sbr.rel (0) target = $region29
    $region28: #{forward.1} parent=1 // pred_region
      %1081 = dma.done [#allocation3], 32
    $region29: #{forward.1} parent=1 // pred_fallthru
      _
    %1082 = vsyncpa [#allocation3], 1

</llo_original>
